<compile_context>
chip_gen: v6e
topology: v6e:2x2x1
jax: 0.10.0
libtpu: 0.0.40
codegen_flags: <defaults>
</compile_context>

<pallas_src>
import jax
import jax.numpy as jnp
from jax.experimental import pallas as pl
from jax.experimental.pallas import tpu as pltpu


_SMALL_C_MAX = 16                      # unrolled VPU MAC up to C*C = 256 FMAs
_TARGET_TILE_BYTES = 2 * 1024 * 1024   # ~2 MiB per (C, Ts) block


def _cg_vpu_kernel(x_ref, w_ref, b_ref, o_ref):
    """Small-C path: unrolled VPU channel MAC, spatial on lanes.

    x_ref, o_ref: (1, C, Ts) VMEM.  w_ref: (C, C) SMEM.  b_ref: (C,) SMEM.
    """
    C = x_ref.shape[1]
    # Load each channel row once: (1, Ts) f32, lane-dense.
    rows = [x_ref[0, ci:ci + 1, :].astype(jnp.float32) for ci in range(C)]
    for co in range(C):
        acc = rows[0] * w_ref[co, 0]
        for ci in range(1, C):
            acc = acc + rows[ci] * w_ref[co, ci]
        acc = acc + b_ref[co]
        gate = jax.nn.sigmoid(acc)                     # EUP, f32
        o_ref[0, co:co + 1, :] = (rows[co] * gate).astype(o_ref.dtype)


def _cg_mxu_kernel(x_ref, w_ref, b_ref, o_ref):
    """Large-C path: lane-dense MXU matmul (C, C) x (C, Ts).

    x_ref, o_ref: (1, C, Ts) VMEM.  w_ref: (C, C) VMEM.  b_ref: (C, 1) VMEM.
    """
    x = x_ref[0]                                       # (C, Ts)
    lin = jnp.dot(w_ref[...], x, preferred_element_type=jnp.float32)
    lin = lin + b_ref[...]                             # (C, 1) broadcasts over lanes
    o_ref[0] = (x.astype(jnp.float32) * jax.nn.sigmoid(lin)).astype(o_ref.dtype)


def _pick_spatial_tile(S, C, itemsize):
    """Largest lane-aligned divisor of S giving a ~2 MiB (C, Ts) block."""
    if S % 128 != 0:
        # Full-extent block is always layout-legal; fine for small / odd S.
        return S
    limit = max(128, _TARGET_TILE_BYTES // max(1, C * itemsize))
    best = 128
    t = 128
    while t <= min(S, limit):
        if S % t == 0:
            best = t
        t += 128
    return best


def context_gating(x_nchw, weight, bias):
    """x_nchw: (N, C, H, W).  weight: (C, C) PyTorch Linear weight.  bias: (C,)."""
    N, C, H, W = x_nchw.shape
    S = H * W
    x3 = x_nchw.reshape(N, C, S)       # contiguous NCHW -> bitcast, no transpose
    ts = _pick_spatial_tile(S, C, x3.dtype.itemsize)
    grid = (N, S // ts)

    x_spec = pl.BlockSpec((1, C, ts), lambda n, s: (n, 0, s))
    out_spec = pl.BlockSpec((1, C, ts), lambda n, s: (n, 0, s))

    if C <= _SMALL_C_MAX:
        kernel = _cg_vpu_kernel
        w_in = weight.astype(jnp.float32)
        b_in = bias.astype(jnp.float32)
        w_spec = pl.BlockSpec(memory_space=pltpu.MemorySpace.SMEM)
        b_spec = pl.BlockSpec(memory_space=pltpu.MemorySpace.SMEM)
    else:
        kernel = _cg_mxu_kernel
        w_in = weight
        b_in = bias.reshape(C, 1)
        # Constant index_map -> keep a single resident buffer (no double-buffer).
        w_spec = pl.BlockSpec((C, C), lambda n, s: (0, 0),
                              pipeline_mode=pl.Buffered(1))
        b_spec = pl.BlockSpec((C, 1), lambda n, s: (0, 0),
                              pipeline_mode=pl.Buffered(1))

    out3 = pl.pallas_call(
        kernel,
        out_shape=jax.ShapeDtypeStruct((N, C, S), x3.dtype),
        grid_spec=pltpu.PrefetchScalarGridSpec(
            num_scalar_prefetch=0,
            grid=grid,
            in_specs=[x_spec, w_spec, b_spec],
            out_specs=out_spec,
        ),
        compiler_params=pltpu.CompilerParams(
            dimension_semantics=("parallel", "parallel"),
        ),
        # Output has the input's exact shape/dtype; let XLA reuse the buffer.
        input_output_aliases={0: 0},
    )(x3, w_in, b_in)

    return out3.reshape(N, C, H, W)


def context_gating_ref(x_nchw, weight, bias):
    """Pure-JAX reference matching the PyTorch module."""
    x_nhwc = jnp.transpose(x_nchw, (0, 2, 3, 1))
    lin = x_nhwc @ weight.T + bias
    lin = jnp.transpose(lin, (0, 3, 1, 2))
    return x_nchw * jax.nn.sigmoid(lin)


if __name__ == "__main__":
    key = jax.random.PRNGKey(0)
    kx, kw, kb = jax.random.split(key, 3)

    N, C, H, W = 2, 4, 16, 16          # input_num = C = 4
    x = jax.random.normal(kx, (N, C, H, W), dtype=jnp.float32)

    # PyTorch Linear parameter shapes: weight (C, C), bias (C,)
    bound = 1.0 / (C ** 0.5)
    weight = jax.random.uniform(kw, (C, C), jnp.float32, -bound, bound)
    bias = jax.random.uniform(kb, (C,), jnp.float32, -bound, bound)

    out = jax.jit(context_gating)(x, weight, bias)
    out = jax.block_until_ready(out)

    ref = context_gating_ref(x, weight, bias)
    assert out.shape == (N, C, H, W)
    assert jnp.allclose(out, ref, atol=1e-5, rtol=1e-5)

    print("KERNEL_OK")
</pallas_src>

<mosaic_0001>
module attributes {stable_mosaic.version = 11 : i64} {
  func.func @_cg_vpu_kernel(%arg0: i32, %arg1: i32, %arg2: memref<1x4x256xf32, #tpu.memory_space<vmem>>, %arg3: memref<4x4xf32, #tpu.memory_space<smem>>, %arg4: memref<4xf32, #tpu.memory_space<smem>>, %arg5: memref<1x4x256xf32, #tpu.memory_space<vmem>>) attributes {dimension_semantics = [#tpu.dimension_semantics<parallel>, #tpu.dimension_semantics<parallel>], iteration_bounds = array<i64: 2, 1>, scalar_prefetch = 0 : i64, scratch_operands = 0 : i64, tpu.core_type = #tpu.core_type<tc>, window_params = [{transform_indices = @transform_0, window_bounds = array<i64: 1, 4, 256>}, {transform_indices = @transform_1, window_bounds = array<i64: 4, 4>}, {transform_indices = @transform_2, window_bounds = array<i64: 4>}, {transform_indices = @transform_3, window_bounds = array<i64: 1, 4, 256>}]} {
    %c0 = arith.constant 0 : index
    %c0_0 = arith.constant 0 : index
    %c0_1 = arith.constant 0 : index
    %0 = vector.load %arg2[%c0, %c0_0, %c0_1] : memref<1x4x256xf32, #tpu.memory_space<vmem>>, vector<1x1x256xf32>
    %1 = vector.shape_cast %0 : vector<1x1x256xf32> to vector<1x256xf32>
    %c0_2 = arith.constant 0 : index
    %c1 = arith.constant 1 : index
    %c0_3 = arith.constant 0 : index
    %2 = vector.load %arg2[%c0_2, %c1, %c0_3] : memref<1x4x256xf32, #tpu.memory_space<vmem>>, vector<1x1x256xf32>
    %3 = vector.shape_cast %2 : vector<1x1x256xf32> to vector<1x256xf32>
    %c0_4 = arith.constant 0 : index
    %c2 = arith.constant 2 : index
    %c0_5 = arith.constant 0 : index
    %4 = vector.load %arg2[%c0_4, %c2, %c0_5] : memref<1x4x256xf32, #tpu.memory_space<vmem>>, vector<1x1x256xf32>
    %5 = vector.shape_cast %4 : vector<1x1x256xf32> to vector<1x256xf32>
    %c0_6 = arith.constant 0 : index
    %c3 = arith.constant 3 : index
    %c0_7 = arith.constant 0 : index
    %6 = vector.load %arg2[%c0_6, %c3, %c0_7] : memref<1x4x256xf32, #tpu.memory_space<vmem>>, vector<1x1x256xf32>
    %7 = vector.shape_cast %6 : vector<1x1x256xf32> to vector<1x256xf32>
    %c0_8 = arith.constant 0 : index
    %c0_9 = arith.constant 0 : index
    %8 = memref.load %arg3[%c0_8, %c0_9] : memref<4x4xf32, #tpu.memory_space<smem>>
    %9 = vector.broadcast %8 : f32 to vector<1x256xf32>
    %10 = arith.mulf %1, %9 : vector<1x256xf32>
    %c0_10 = arith.constant 0 : index
    %c1_11 = arith.constant 1 : index
    %11 = memref.load %arg3[%c0_10, %c1_11] : memref<4x4xf32, #tpu.memory_space<smem>>
    %12 = vector.broadcast %11 : f32 to vector<1x256xf32>
    %13 = arith.mulf %3, %12 : vector<1x256xf32>
    %14 = arith.addf %10, %13 : vector<1x256xf32>
    %c0_12 = arith.constant 0 : index
    %c2_13 = arith.constant 2 : index
    %15 = memref.load %arg3[%c0_12, %c2_13] : memref<4x4xf32, #tpu.memory_space<smem>>
    %16 = vector.broadcast %15 : f32 to vector<1x256xf32>
    %17 = arith.mulf %5, %16 : vector<1x256xf32>
    %18 = arith.addf %14, %17 : vector<1x256xf32>
    %c0_14 = arith.constant 0 : index
    %c3_15 = arith.constant 3 : index
    %19 = memref.load %arg3[%c0_14, %c3_15] : memref<4x4xf32, #tpu.memory_space<smem>>
    %20 = vector.broadcast %19 : f32 to vector<1x256xf32>
    %21 = arith.mulf %7, %20 : vector<1x256xf32>
    %22 = arith.addf %18, %21 : vector<1x256xf32>
    %c0_16 = arith.constant 0 : index
    %23 = memref.load %arg4[%c0_16] : memref<4xf32, #tpu.memory_space<smem>>
    %24 = vector.broadcast %23 : f32 to vector<1x256xf32>
    %25 = arith.addf %22, %24 : vector<1x256xf32>
    %26 = arith.negf %25 : vector<1x256xf32>
    %27 = math.exp %26 : vector<1x256xf32>
    %cst = arith.constant 1.000000e+00 : f32
    %28 = vector.broadcast %cst : f32 to vector<1x256xf32>
    %29 = arith.addf %28, %27 : vector<1x256xf32>
    %30 = arith.divf %28, %29 : vector<1x256xf32>
    %31 = arith.mulf %1, %30 : vector<1x256xf32>
    %c0_17 = arith.constant 0 : index
    %c0_18 = arith.constant 0 : index
    %c0_19 = arith.constant 0 : index
    %32 = vector.load %arg5[%c0_17, %c0_18, %c0_19] : memref<1x4x256xf32, #tpu.memory_space<vmem>>, vector<1x1x256xf32>
    %33 = vector.shape_cast %32 : vector<1x1x256xf32> to vector<1x256xf32>
    %34 = vector.shape_cast %31 : vector<1x256xf32> to vector<1x1x256xf32>
    tpu.vector_store %arg5[%c0_17, %c0_18, %c0_19], %34 {strides = array<i32>} : memref<1x4x256xf32, #tpu.memory_space<vmem>>, vector<1x1x256xf32>,
    %c1_20 = arith.constant 1 : index
    %c0_21 = arith.constant 0 : index
    %35 = memref.load %arg3[%c1_20, %c0_21] : memref<4x4xf32, #tpu.memory_space<smem>>
    %36 = vector.broadcast %35 : f32 to vector<1x256xf32>
    %37 = arith.mulf %1, %36 : vector<1x256xf32>
    %c1_22 = arith.constant 1 : index
    %c1_23 = arith.constant 1 : index
    %38 = memref.load %arg3[%c1_22, %c1_23] : memref<4x4xf32, #tpu.memory_space<smem>>
    %39 = vector.broadcast %38 : f32 to vector<1x256xf32>
    %40 = arith.mulf %3, %39 : vector<1x256xf32>
    %41 = arith.addf %37, %40 : vector<1x256xf32>
    %c1_24 = arith.constant 1 : index
    %c2_25 = arith.constant 2 : index
    %42 = memref.load %arg3[%c1_24, %c2_25] : memref<4x4xf32, #tpu.memory_space<smem>>
    %43 = vector.broadcast %42 : f32 to vector<1x256xf32>
    %44 = arith.mulf %5, %43 : vector<1x256xf32>
    %45 = arith.addf %41, %44 : vector<1x256xf32>
    %c1_26 = arith.constant 1 : index
    %c3_27 = arith.constant 3 : index
    %46 = memref.load %arg3[%c1_26, %c3_27] : memref<4x4xf32, #tpu.memory_space<smem>>
    %47 = vector.broadcast %46 : f32 to vector<1x256xf32>
    %48 = arith.mulf %7, %47 : vector<1x256xf32>
    %49 = arith.addf %45, %48 : vector<1x256xf32>
    %c1_28 = arith.constant 1 : index
    %50 = memref.load %arg4[%c1_28] : memref<4xf32, #tpu.memory_space<smem>>
    %51 = vector.broadcast %50 : f32 to vector<1x256xf32>
    %52 = arith.addf %49, %51 : vector<1x256xf32>
    %53 = arith.negf %52 : vector<1x256xf32>
    %54 = math.exp %53 : vector<1x256xf32>
    %cst_29 = arith.constant 1.000000e+00 : f32
    %55 = vector.broadcast %cst_29 : f32 to vector<1x256xf32>
    %56 = arith.addf %55, %54 : vector<1x256xf32>
    %57 = arith.divf %55, %56 : vector<1x256xf32>
    %58 = arith.mulf %3, %57 : vector<1x256xf32>
    %c0_30 = arith.constant 0 : index
    %c1_31 = arith.constant 1 : index
    %c0_32 = arith.constant 0 : index
    %59 = vector.load %arg5[%c0_30, %c1_31, %c0_32] : memref<1x4x256xf32, #tpu.memory_space<vmem>>, vector<1x1x256xf32>
    %60 = vector.shape_cast %59 : vector<1x1x256xf32> to vector<1x256xf32>
    %61 = vector.shape_cast %58 : vector<1x256xf32> to vector<1x1x256xf32>
    tpu.vector_store %arg5[%c0_30, %c1_31, %c0_32], %61 {strides = array<i32>} : memref<1x4x256xf32, #tpu.memory_space<vmem>>, vector<1x1x256xf32>,
    %c2_33 = arith.constant 2 : index
    %c0_34 = arith.constant 0 : index
    %62 = memref.load %arg3[%c2_33, %c0_34] : memref<4x4xf32, #tpu.memory_space<smem>>
    %63 = vector.broadcast %62 : f32 to vector<1x256xf32>
    %64 = arith.mulf %1, %63 : vector<1x256xf32>
    %c2_35 = arith.constant 2 : index
    %c1_36 = arith.constant 1 : index
    %65 = memref.load %arg3[%c2_35, %c1_36] : memref<4x4xf32, #tpu.memory_space<smem>>
    %66 = vector.broadcast %65 : f32 to vector<1x256xf32>
    %67 = arith.mulf %3, %66 : vector<1x256xf32>
    %68 = arith.addf %64, %67 : vector<1x256xf32>
    %c2_37 = arith.constant 2 : index
    %c2_38 = arith.constant 2 : index
    %69 = memref.load %arg3[%c2_37, %c2_38] : memref<4x4xf32, #tpu.memory_space<smem>>
    %70 = vector.broadcast %69 : f32 to vector<1x256xf32>
    %71 = arith.mulf %5, %70 : vector<1x256xf32>
    %72 = arith.addf %68, %71 : vector<1x256xf32>
    %c2_39 = arith.constant 2 : index
    %c3_40 = arith.constant 3 : index
    %73 = memref.load %arg3[%c2_39, %c3_40] : memref<4x4xf32, #tpu.memory_space<smem>>
    %74 = vector.broadcast %73 : f32 to vector<1x256xf32>
    %75 = arith.mulf %7, %74 : vector<1x256xf32>
    %76 = arith.addf %72, %75 : vector<1x256xf32>
    %c2_41 = arith.constant 2 : index
    %77 = memref.load %arg4[%c2_41] : memref<4xf32, #tpu.memory_space<smem>>
    %78 = vector.broadcast %77 : f32 to vector<1x256xf32>
    %79 = arith.addf %76, %78 : vector<1x256xf32>
    %80 = arith.negf %79 : vector<1x256xf32>
    %81 = math.exp %80 : vector<1x256xf32>
    %cst_42 = arith.constant 1.000000e+00 : f32
    %82 = vector.broadcast %cst_42 : f32 to vector<1x256xf32>
    %83 = arith.addf %82, %81 : vector<1x256xf32>
    %84 = arith.divf %82, %83 : vector<1x256xf32>
    %85 = arith.mulf %5, %84 : vector<1x256xf32>
    %c0_43 = arith.constant 0 : index
    %c2_44 = arith.constant 2 : index
    %c0_45 = arith.constant 0 : index
    %86 = vector.load %arg5[%c0_43, %c2_44, %c0_45] : memref<1x4x256xf32, #tpu.memory_space<vmem>>, vector<1x1x256xf32>
    %87 = vector.shape_cast %86 : vector<1x1x256xf32> to vector<1x256xf32>
    %88 = vector.shape_cast %85 : vector<1x256xf32> to vector<1x1x256xf32>
    tpu.vector_store %arg5[%c0_43, %c2_44, %c0_45], %88 {strides = array<i32>} : memref<1x4x256xf32, #tpu.memory_space<vmem>>, vector<1x1x256xf32>,
    %c3_46 = arith.constant 3 : index
    %c0_47 = arith.constant 0 : index
    %89 = memref.load %arg3[%c3_46, %c0_47] : memref<4x4xf32, #tpu.memory_space<smem>>
    %90 = vector.broadcast %89 : f32 to vector<1x256xf32>
    %91 = arith.mulf %1, %90 : vector<1x256xf32>
    %c3_48 = arith.constant 3 : index
    %c1_49 = arith.constant 1 : index
    %92 = memref.load %arg3[%c3_48, %c1_49] : memref<4x4xf32, #tpu.memory_space<smem>>
    %93 = vector.broadcast %92 : f32 to vector<1x256xf32>
    %94 = arith.mulf %3, %93 : vector<1x256xf32>
    %95 = arith.addf %91, %94 : vector<1x256xf32>
    %c3_50 = arith.constant 3 : index
    %c2_51 = arith.constant 2 : index
    %96 = memref.load %arg3[%c3_50, %c2_51] : memref<4x4xf32, #tpu.memory_space<smem>>
    %97 = vector.broadcast %96 : f32 to vector<1x256xf32>
    %98 = arith.mulf %5, %97 : vector<1x256xf32>
    %99 = arith.addf %95, %98 : vector<1x256xf32>
    %c3_52 = arith.constant 3 : index
    %c3_53 = arith.constant 3 : index
    %100 = memref.load %arg3[%c3_52, %c3_53] : memref<4x4xf32, #tpu.memory_space<smem>>
    %101 = vector.broadcast %100 : f32 to vector<1x256xf32>
    %102 = arith.mulf %7, %101 : vector<1x256xf32>
    %103 = arith.addf %99, %102 : vector<1x256xf32>
    %c3_54 = arith.constant 3 : index
    %104 = memref.load %arg4[%c3_54] : memref<4xf32, #tpu.memory_space<smem>>
    %105 = vector.broadcast %104 : f32 to vector<1x256xf32>
    %106 = arith.addf %103, %105 : vector<1x256xf32>
    %107 = arith.negf %106 : vector<1x256xf32>
    %108 = math.exp %107 : vector<1x256xf32>
    %cst_55 = arith.constant 1.000000e+00 : f32
    %109 = vector.broadcast %cst_55 : f32 to vector<1x256xf32>
    %110 = arith.addf %109, %108 : vector<1x256xf32>
    %111 = arith.divf %109, %110 : vector<1x256xf32>
    %112 = arith.mulf %7, %111 : vector<1x256xf32>
    %c0_56 = arith.constant 0 : index
    %c3_57 = arith.constant 3 : index
    %c0_58 = arith.constant 0 : index
    %113 = vector.load %arg5[%c0_56, %c3_57, %c0_58] : memref<1x4x256xf32, #tpu.memory_space<vmem>>, vector<1x1x256xf32>
    %114 = vector.shape_cast %113 : vector<1x1x256xf32> to vector<1x256xf32>
    %115 = vector.shape_cast %112 : vector<1x256xf32> to vector<1x1x256xf32>
    tpu.vector_store %arg5[%c0_56, %c3_57, %c0_58], %115 {strides = array<i32>} : memref<1x4x256xf32, #tpu.memory_space<vmem>>, vector<1x1x256xf32>,
    return
  }
  func.func @transform_0(%arg0: i32, %arg1: i32) -> (i32, i32, i32) {
    %c0_i32 = arith.constant 0 : i32
    %c0_i32_0 = arith.constant 0 : i32
    return %arg0, %c0_i32, %arg1 : i32, i32, i32
  }
  func.func @transform_1(%arg0: i32, %arg1: i32) -> (i32, i32) {
    %c0_i32 = arith.constant 0 : i32
    %c0_i32_0 = arith.constant 0 : i32
    %c0_i32_1 = arith.constant 0 : i32
    return %c0_i32, %c0_i32_0 : i32, i32
  }
  func.func @transform_2(%arg0: i32, %arg1: i32) -> i32 {
    %c0_i32 = arith.constant 0 : i32
    %c0_i32_0 = arith.constant 0 : i32
    return %c0_i32 : i32
  }
  func.func @transform_3(%arg0: i32, %arg1: i32) -> (i32, i32, i32) {
    %c0_i32 = arith.constant 0 : i32
    %c0_i32_0 = arith.constant 0 : i32
    return %arg0, %c0_i32, %arg1 : i32, i32, i32
  }
}

</mosaic_0001>

<llo_original>
// kernel: context_gating.1
$region0: #{context_gating.1}
  #allocation0 [shape = 'u32[]', space=smem, size = 0x4, offset = 0x4, fixed_abs, tag = 'smem constant byte address 0x4 - core index']
  #allocation1 [shape = 'u32[144,128]{1,0:T(1,128)}', space=vmem, size = 0x12000, scoped, tag = 'internal scratch']
  %s0 = inlined_call_operand.vmem [shape: f32[2,4,256], index: 0, kind: input, shape index: {}, may-alias: {0,3}]
  %s1 = inlined_call_operand.vmem [shape: f32[4,4], index: 1, kind: input, shape index: {}]
  %s2 = inlined_call_operand.vmem [shape: f32[4], index: 2, kind: input, shape index: {}]
  %s3 = inlined_call_operand.vmem [shape: f32[2,4,256], index: 3, kind: output, shape index: {}, may-alias: {0,3}]
  %s4 = sld [smem:[#allocation0]]
  $region53: #{context_gating.1} parent=0
    _
  %s6 = ssub.s32 1, %s4
  %s7 = scalar_select 0, %s6, %s4
  $region1: #{context_gating.1} parent=0
    #allocation2 [shape = 'u8[2048]{0}', space=smem, size = 0x800, scoped, tag = 'input window, operand 1, single buffered']
    #allocation3 [shape = 's32[2]{0}', space=sflag, size = 0x8, scoped, tag = 'scoped memory for context_gating.1']
    #allocation4 [shape = 'u8[512]{0}', space=smem, size = 0x200, scoped, tag = 'input window, operand 2, single buffered']
    #allocation5 [shape = 's32[1]{0}', space=sflag, size = 0x4, scoped, tag = 'scoped memory for context_gating.1']
    %8 = vsyncpa [#allocation3], 0
    %9 = vsyncpa [#allocation5], 0
    loop: start=0, step=1, limit=4
    $region2: #{context_gating.1} parent=1 // loop_pre_header
      _
    $region3: #{context_gating.1} parent=1 // loop_header
      %s11 = sphi 0, %s15
      %p12 = scmp.ge.s32.totalorder %s11, 4
      %s18 = sphi 0, %s30
      %s19 = sphi 0, %s26
      %s20 = sphi 0, %s18
      %s21 = sphi 0, %s19
      %s22 = sphi 0, %s20
      %s23 = sphi 0, %s21
      %s35 = sphi 0, %s37
      %s38 = sphi 0, %s35
      %s39 = sphi 0, %s38
      %s55 = sphi 0, %s39
      %s59 = sphi 0, %s59
      %s61 = sphi 0, %s59
      %s62 = sphi 0, %s61
      %s76 = sphi 0, %s62
      %s80 = sphi 0, %s80
      %s82 = sphi 0, %s80
      %s83 = sphi 0, %s82
      %s97 = sphi 0, %s83
      %s105 = sphi 0, %s107
      %s108 = sphi 0, %s105
      %s109 = sphi 0, %s108
      %s125 = sphi 0, %s109
    $region4: #{context_gating.1} parent=1 // loop_header_branch
      %14 = sbr.rel (%p12) target = $region8
    $region5: #{context_gating.1} parent=1 // loop_body
      %s16 = ssub.s32 %s11, 1
      %s17 = ssub.s32 %s11, 2
      %s24 = sadd.s32 1, %s19
      %p25 = scmp.ge.s32.totalorder %s24, 1
      %s26 = scalar_select %p25, 0, %s24
      %s27 = sadd.s32 1, %s18
      %s28 = scalar_select %p25, %s27, %s18
      %p29 = scmp.ge.s32.totalorder %s28, 2
      %s30 = scalar_select %p29, 0, %s28
      %s31 = ssub.s32 %s18, %s30
      %s32 = ssub.s32 %s19, %s26
      %s33 = sor.u32 %s31, %s32
      %p34 = scmp.eq.s32.totalorder %s33, 0
      %s36 = sadd.s32 %s35, 1
      %s37 = scalar_select %p34, %s35, %s36
      %p40 = pneg %p34
      %p41 = scmp.eq.s32.totalorder %s11, 1
      %p42 = por %p40, %p41
      %p43 = scmp.ne.s32.totalorder %s35, %s38
      %p44 = scmp.eq.s32.totalorder %s11, 0
      %p45 = por %p43, %p44
      %p46 = scmp.ne.s32.totalorder %s35, %s38
      %p47 = scmp.eq.s32.totalorder %s16, 1
      %p48 = por %p46, %p47
      %p49 = scmp.ne.s32.totalorder %s38, %s39
      %p50 = scmp.eq.s32.totalorder %s16, 0
      %p51 = por %p49, %p50
      %p52 = scmp.ne.s32.totalorder %s38, %s39
      %p53 = scmp.eq.s32.totalorder %s17, 1
      %p54 = por %p52, %p53
      %p56 = scmp.ne.s32.totalorder %s39, %s55
      %p57 = scmp.eq.s32.totalorder %s17, 0
      %p58 = por %p56, %p57
      %s60 = sadd.s32 %s59, 1
      %p63 = scmp.eq.s32.totalorder %s11, 1
      %p64 = scmp.ne.s32.totalorder %s59, %s61
      %p65 = scmp.eq.s32.totalorder %s11, 0
      %p66 = por %p64, %p65
      %p67 = scmp.ne.s32.totalorder %s59, %s61
      %p68 = scmp.eq.s32.totalorder %s16, 1
      %p69 = por %p67, %p68
      %p70 = scmp.ne.s32.totalorder %s61, %s62
      %p71 = scmp.eq.s32.totalorder %s16, 0
      %p72 = por %p70, %p71
      %p73 = scmp.ne.s32.totalorder %s61, %s62
      %p74 = scmp.eq.s32.totalorder %s17, 1
      %p75 = por %p73, %p74
      %p77 = scmp.ne.s32.totalorder %s62, %s76
      %p78 = scmp.eq.s32.totalorder %s17, 0
      %p79 = por %p77, %p78
      %s81 = sadd.s32 %s80, 1
      %p84 = scmp.eq.s32.totalorder %s11, 1
      %p85 = scmp.ne.s32.totalorder %s80, %s82
      %p86 = scmp.eq.s32.totalorder %s11, 0
      %p87 = por %p85, %p86
      %p88 = scmp.ne.s32.totalorder %s80, %s82
      %p89 = scmp.eq.s32.totalorder %s16, 1
      %p90 = por %p88, %p89
      %p91 = scmp.ne.s32.totalorder %s82, %s83
      %p92 = scmp.eq.s32.totalorder %s16, 0
      %p93 = por %p91, %p92
      %p94 = scmp.ne.s32.totalorder %s82, %s83
      %p95 = scmp.eq.s32.totalorder %s17, 1
      %p96 = por %p94, %p95
      %p98 = scmp.ne.s32.totalorder %s83, %s97
      %p99 = scmp.eq.s32.totalorder %s17, 0
      %p100 = por %p98, %p99
      %s101 = ssub.s32 %s18, %s30
      %s102 = ssub.s32 %s19, %s26
      %s103 = sor.u32 %s101, %s102
      %p104 = scmp.eq.s32.totalorder %s103, 0
      %s106 = sadd.s32 %s105, 1
      %s107 = scalar_select %p104, %s105, %s106
      %p110 = pneg %p104
      %p111 = scmp.eq.s32.totalorder %s11, 1
      %p112 = por %p110, %p111
      %p113 = scmp.ne.s32.totalorder %s105, %s108
      %p114 = scmp.eq.s32.totalorder %s11, 0
      %p115 = por %p113, %p114
      %p116 = scmp.ne.s32.totalorder %s105, %s108
      %p117 = scmp.eq.s32.totalorder %s16, 1
      %p118 = por %p116, %p117
      %p119 = scmp.ne.s32.totalorder %s108, %s109
      %p120 = scmp.eq.s32.totalorder %s16, 0
      %p121 = por %p119, %p120
      %p122 = scmp.ne.s32.totalorder %s108, %s109
      %p123 = scmp.eq.s32.totalorder %s17, 1
      %p124 = por %p122, %p123
      %p126 = scmp.ne.s32.totalorder %s109, %s125
      %p127 = scmp.eq.s32.totalorder %s17, 0
      %p128 = por %p126, %p127
      %p129 = scmp.le.s32.totalorder 1, %s11
      %p130 = scmp.lt.s32.totalorder %s11, 3
      %p131 = pnand %p129, %p130
      %p132 = pneg %p131
      // Predicated region
      $region9: #{context_gating.1} parent=5 // pred_check
        _
      $region10: #{context_gating.1} parent=5 // pred_check_branch
        %134 = sbr.rel (%p131) target = $region12
      $region11: #{context_gating.1} parent=5 // pred_region
        %s135 = ssub.s32 %s11, 1
        // Predicated region
        $region13: #{context_gating.1} parent=11 // pred_check
          %p136 = pneg %p72
        $region14: #{context_gating.1} parent=11 // pred_check_branch
          %138 = sbr.rel (%p136) target = $region16
        $region15: #{context_gating.1} parent=11 // pred_region
          %s140 = ssub.s32 64, 64
          %141 = vsyncadd [#allocation3], %s140
          %s143 = sshll.u32 %s1, 4
          %s144 = int_to_ptr.vmem [resolvable:$true] %s143
          %146 = dma.vmem_to_smem %s144, 64, [#allocation2], [#allocation3]
        $region16: #{context_gating.1} parent=11 // pred_fallthru
          _
        // Predicated region
        $region17: #{context_gating.1} parent=11 // pred_check
          %p147 = pneg %p93
        $region18: #{context_gating.1} parent=11 // pred_check_branch
          %149 = sbr.rel (%p147) target = $region20
        $region19: #{context_gating.1} parent=11 // pred_region
          %s151 = ssub.s32 16, 16
          %152 = vsyncadd [#allocation5], %s151
          %s154 = sshll.u32 %s2, 4
          %s155 = int_to_ptr.vmem [resolvable:$true] %s154
          %157 = dma.vmem_to_smem %s155, 16, [#allocation4], [#allocation5]
        $region20: #{context_gating.1} parent=11 // pred_fallthru
          _
      $region12: #{context_gating.1} parent=5 // pred_fallthru
        _
      %p158 = scmp.lt.s32.totalorder %s11, 2
      // Predicated region
      $region21: #{context_gating.1} parent=5 // pred_check
        %p159 = pneg %p158
      $region22: #{context_gating.1} parent=5 // pred_check_branch
        %161 = sbr.rel (%p159) target = $region24
      $region23: #{context_gating.1} parent=5 // pred_region
        // Predicated region
        $region25: #{context_gating.1} parent=23 // pred_check
          %p162 = pneg %p45
        $region26: #{context_gating.1} parent=23 // pred_check_branch
          %164 = sbr.rel (%p162) target = $region28
        $region27: #{context_gating.1} parent=23 // pred_region
          %s165 = smul.u32 2, %s19
          %p166 = scmp.lt.s32.totalorder %s18, 1
          %s167 = scalar_select %p166, %s18, 1
          %p168 = scmp.lt.s32.totalorder %s165, 1
          %s169 = scalar_select %p168, %s165, 1
          %s170 = smul.addr %s167, 2
          %s171 = sadd.s32 %s169, %s170
          %s172 = smul.addr %s171, 4
          %s173 = scalar_lea.vmem %s0, %s172
          %s174 = smul.u32 2, %s19
        $region28: #{context_gating.1} parent=23 // pred_fallthru
          _
      $region24: #{context_gating.1} parent=5 // pred_fallthru
        _
      %p175 = scmp.le.s32.totalorder 1, %s11
      %p176 = scmp.lt.s32.totalorder %s11, 3
      %p177 = pnand %p175, %p176
      %p178 = pneg %p177
      // Predicated region
      $region29: #{context_gating.1} parent=5 // pred_check
        _
      $region30: #{context_gating.1} parent=5 // pred_check_branch
        %180 = sbr.rel (%p177) target = $region32
      $region31: #{context_gating.1} parent=5 // pred_region
        %s181 = ssub.s32 %s11, 1
        // Predicated region
        $region33: #{context_gating.1} parent=31 // pred_check
          %p182 = pneg %p72
        $region34: #{context_gating.1} parent=31 // pred_check_branch
          %184 = sbr.rel (%p182) target = $region36
        $region35: #{context_gating.1} parent=31 // pred_region
          %185 = dma.done [#allocation3], 64
        $region36: #{context_gating.1} parent=31 // pred_fallthru
          _
        // Predicated region
        $region37: #{context_gating.1} parent=31 // pred_check
          %p186 = pneg %p93
        $region38: #{context_gating.1} parent=31 // pred_check_branch
          %188 = sbr.rel (%p186) target = $region40
        $region39: #{context_gating.1} parent=31 // pred_region
          %189 = dma.done [#allocation5], 16
        $region40: #{context_gating.1} parent=31 // pred_fallthru
          _
        %190 = sfence
        %s191 = smul.u32 2, %s21
        %p192 = scmp.lt.s32.totalorder %s20, 1
        %s193 = scalar_select %p192, %s20, 1
        %p194 = scmp.lt.s32.totalorder %s191, 1
        %s195 = scalar_select %p194, %s191, 1
        %s196 = smul.addr %s193, 2
        %s197 = sadd.s32 %s195, %s196
        %s198 = smul.addr %s197, 4
        %s199 = scalar_lea.vmem %s0, %s198
        %p200 = pneg %p51
        %p201 = pneg %p48
        %p202 = pneg %p72
        %p203 = pneg %p69
        %p204 = pneg %p93
        %p205 = pneg %p90
        %p206 = pneg %p121
        %p207 = pneg %p118
        %s208 = smul.u32 2, %s21
        %p209 = scmp.lt.s32.totalorder %s20, 1
        %s210 = scalar_select %p209, %s20, 1
        %p211 = scmp.lt.s32.totalorder %s208, 1
        %s212 = scalar_select %p211, %s208, 1
        %s213 = smul.addr %s210, 2
        %s214 = sadd.s32 %s212, %s213
        %s215 = smul.addr %s214, 4
        %s216 = scalar_lea.vmem %s3, %s215
        %s217 = smul.u32 2, %s21
        %p218 = scmp.lt.s32.totalorder %s20, 1
        %s219 = scalar_select %p218, %s20, 1
        %p220 = scmp.lt.s32.totalorder %s217, 1
        %s221 = scalar_select %p220, %s217, 1
        %s222 = smul.addr %s219, 2
        %s223 = sadd.s32 %s221, %s222
        %s224 = smul.addr %s223, 4
        %s225 = scalar_lea.vmem %s0, %s224
        %s226 = smul.u32 2, %s21
        %s227 = smul.u32 2, %s21
        %p228 = scmp.lt.s32.totalorder %s20, 1
        %s229 = scalar_select %p228, %s20, 1
        %p230 = scmp.lt.s32.totalorder %s227, 1
        %s231 = scalar_select %p230, %s227, 1
        %s232 = smul.addr %s229, 2
        %s233 = sadd.s32 %s231, %s232
        %s234 = smul.addr %s233, 4
        %s235 = scalar_lea.vmem %s3, %s234
        %s236 = smul.u32 2, %s21
        %v237 = vld [vmem:[%s225] ss:$4 sm:$0x3]
        %s238 = scalar_lea.vmem %s225, 1
        %v239 = vld [vmem:[%s238] ss:$4 sm:$0x3]
        %s240 = scalar_lea.vmem %s225, 2
        %v241 = vld [vmem:[%s240] ss:$4 sm:$0x3]
        %s242 = scalar_lea.vmem %s225, 3
        %v243 = vld [vmem:[%s242] ss:$4 sm:$0x3]
        %s244 = sld [smem:[#allocation2]]
        %v245 = vstv %s244
        %v246 = vmul.f32 %v237, %v245
        %s247 = sld [smem:[#allocation2 + $0x1]]
        %v248 = vstv %s247
        %v249 = vmul.f32 %v239, %v248
        %v250 = vadd.f32 %v246, %v249
        %s251 = sld [smem:[#allocation2 + $0x2]]
        %v252 = vstv %s251
        %v253 = vmul.f32 %v241, %v252
        %v254 = vadd.f32 %v250, %v253
        %s255 = sld [smem:[#allocation2 + $0x3]]
        %v256 = vstv %s255
        %v257 = vmul.f32 %v243, %v256
        %v258 = vadd.f32 %v254, %v257
        %s259 = sld [smem:[#allocation4]]
        %v260 = vstv %s259
        %v261 = vadd.f32 %v258, %v260
        %v262 = vxor.u32 %v261, 2147483648
        %v263 = vmul.f32 %v262, 1.442695
        %v264 = vpow.pop %v263
        %v265 = vadd.f32 %v264, 1.0
        %v266 = vrcp.pop %v265
        %v267 = vmul.f32 1.0, %v266
        %v268 = vmul.f32 %v237, %v267
        %v269 = vlaneseq
        %vm270 = vcmp.ge.s32.totalorder %v269, 0
        %vm271 = vcmp.lt.s32.totalorder %v269, 256
        %vm272 = vmand %vm270, %vm271
        %273 = vst.msk [vmem:[%s235] ss:$4 sm:$0x3] %vm272, %v268
        %s274 = sld [smem:[#allocation2 + $0x80]]
        %v275 = vstv %s274
        %v276 = vmul.f32 %v237, %v275
        %s277 = sld [smem:[#allocation2 + $0x81]]
        %v278 = vstv %s277
        %v279 = vmul.f32 %v239, %v278
        %v280 = vadd.f32 %v276, %v279
        %s281 = sld [smem:[#allocation2 + $0x82]]
        %v282 = vstv %s281
        %v283 = vmul.f32 %v241, %v282
        %v284 = vadd.f32 %v280, %v283
        %s285 = sld [smem:[#allocation2 + $0x83]]
        %v286 = vstv %s285
        %v287 = vmul.f32 %v243, %v286
        %v288 = vadd.f32 %v284, %v287
        %s289 = sld [smem:[#allocation4 + $0x1]]
        %v290 = vstv %s289
        %v291 = vadd.f32 %v288, %v290
        %v292 = vxor.u32 %v291, 2147483648
        %v293 = vmul.f32 %v292, 1.442695
        %v294 = vpow.pop %v293
        %v295 = vadd.f32 %v294, 1.0
        %v296 = vrcp.pop %v295
        %v297 = vmul.f32 1.0, %v296
        %v298 = vmul.f32 %v239, %v297
        %s299 = scalar_lea.vmem %s235, 1
        %300 = vst.msk [vmem:[%s299] ss:$4 sm:$0x3] %vm272, %v298
        %s301 = sld [smem:[#allocation2 + $0x100]]
        %v302 = vstv %s301
        %v303 = vmul.f32 %v237, %v302
        %s304 = sld [smem:[#allocation2 + $0x101]]
        %v305 = vstv %s304
        %v306 = vmul.f32 %v239, %v305
        %v307 = vadd.f32 %v303, %v306
        %s308 = sld [smem:[#allocation2 + $0x102]]
        %v309 = vstv %s308
        %v310 = vmul.f32 %v241, %v309
        %v311 = vadd.f32 %v307, %v310
        %s312 = sld [smem:[#allocation2 + $0x103]]
        %v313 = vstv %s312
        %v314 = vmul.f32 %v243, %v313
        %v315 = vadd.f32 %v311, %v314
        %s316 = sld [smem:[#allocation4 + $0x2]]
        %v317 = vstv %s316
        %v318 = vadd.f32 %v315, %v317
        %v319 = vxor.u32 %v318, 2147483648
        %v320 = vmul.f32 %v319, 1.442695
        %v321 = vpow.pop %v320
        %v322 = vadd.f32 %v321, 1.0
        %v323 = vrcp.pop %v322
        %v324 = vmul.f32 1.0, %v323
        %v325 = vmul.f32 %v241, %v324
        %s326 = scalar_lea.vmem %s235, 2
        %327 = vst.msk [vmem:[%s326] ss:$4 sm:$0x3] %vm272, %v325
        %s328 = sld [smem:[#allocation2 + $0x180]]
        %v329 = vstv %s328
        %v330 = vmul.f32 %v237, %v329
        %s331 = sld [smem:[#allocation2 + $0x181]]
        %v332 = vstv %s331
        %v333 = vmul.f32 %v239, %v332
        %v334 = vadd.f32 %v330, %v333
        %s335 = sld [smem:[#allocation2 + $0x182]]
        %v336 = vstv %s335
        %v337 = vmul.f32 %v241, %v336
        %v338 = vadd.f32 %v334, %v337
        %s339 = sld [smem:[#allocation2 + $0x183]]
        %v340 = vstv %s339
        %v341 = vmul.f32 %v243, %v340
        %v342 = vadd.f32 %v338, %v341
        %s343 = sld [smem:[#allocation4 + $0x3]]
        %v344 = vstv %s343
        %v345 = vadd.f32 %v342, %v344
        %v346 = vxor.u32 %v345, 2147483648
        %v347 = vmul.f32 %v346, 1.442695
        %v348 = vpow.pop %v347
        %v349 = vadd.f32 %v348, 1.0
        %v350 = vrcp.pop %v349
        %v351 = vmul.f32 1.0, %v350
        %v352 = vmul.f32 %v243, %v351
        %s353 = scalar_lea.vmem %s235, 3
        %354 = vst.msk [vmem:[%s353] ss:$4 sm:$0x3] %vm272, %v352
        %s355 = smul.u32 2, %s21
        %p356 = scmp.lt.s32.totalorder %s20, 1
        %s357 = scalar_select %p356, %s20, 1
        %p358 = scmp.lt.s32.totalorder %s355, 1
        %s359 = scalar_select %p358, %s355, 1
        %s360 = smul.addr %s357, 2
        %s361 = sadd.s32 %s359, %s360
        %s362 = smul.addr %s361, 4
        %s363 = scalar_lea.vmem %s3, %s362
        // Predicated region
        $region41: #{context_gating.1} parent=31 // pred_check
          %p364 = pneg %p118
        $region42: #{context_gating.1} parent=31 // pred_check_branch
          %366 = sbr.rel (%p364) target = $region44
        $region43: #{context_gating.1} parent=31 // pred_region
          %s367 = smul.u32 2, %s21
        $region44: #{context_gating.1} parent=31 // pred_fallthru
          _
      $region32: #{context_gating.1} parent=5 // pred_fallthru
        _
      %p368 = scmp.le.s32.totalorder 2, %s11
      // Predicated region
      $region45: #{context_gating.1} parent=5 // pred_check
        %p369 = pneg %p368
      $region46: #{context_gating.1} parent=5 // pred_check_branch
        %371 = sbr.rel (%p369) target = $region48
      $region47: #{context_gating.1} parent=5 // pred_region
        %s372 = ssub.s32 %s11, 2
        // Predicated region
        $region49: #{context_gating.1} parent=47 // pred_check
          %p373 = pneg %p124
        $region50: #{context_gating.1} parent=47 // pred_check_branch
          %375 = sbr.rel (%p373) target = $region52
        $region51: #{context_gating.1} parent=47 // pred_region
          %s376 = smul.u32 2, %s23
          %p377 = scmp.lt.s32.totalorder %s22, 1
          %s378 = scalar_select %p377, %s22, 1
          %p379 = scmp.lt.s32.totalorder %s376, 1
          %s380 = scalar_select %p379, %s376, 1
          %s381 = smul.addr %s378, 2
          %s382 = sadd.s32 %s380, %s381
          %s383 = smul.addr %s382, 4
          %s384 = scalar_lea.vmem %s3, %s383
        $region52: #{context_gating.1} parent=47 // pred_fallthru
          _
      $region48: #{context_gating.1} parent=5 // pred_fallthru
        _
    $region6: #{context_gating.1} parent=1 // loop_footer
      %s15 = sadd.s32 1, %s11
    $region7: #{context_gating.1} parent=1 // loop_footer_branch
      %10 = sbr.rel target = $region3
    $region8: #{context_gating.1} parent=1 // loop_exit
      _
    %385 = vsyncpa [#allocation3], 1
    %s386 = scalar_lea.sflag [#allocation3], 1
    %387 = vsyncpa %s386, 1
    %388 = vsyncpa [#allocation5], 1

</llo_original>
